<compile_context>
chip_gen: v7x
topology: tpu7x:2x2x1
jax: 0.10.0
libtpu: 0.0.40
codegen_flags: <defaults>
</compile_context>

<pallas_src>
import jax
import jax.numpy as jnp
from jax.experimental import pallas as pl
from jax.experimental.pallas import tpu as pltpu


def _round_up(n, m):
    return ((n + m - 1) // m) * m


def mine_kernel(x_ref, y_ref, w1x_ref, w1y_ref, b1_ref, w2_ref, b2_ref, o_ref):
    # Two MXU matmuls, f32 accumulation.
    hx = jnp.dot(x_ref[...], w1x_ref[...], preferred_element_type=jnp.float32)
    hy = jnp.dot(y_ref[...], w1y_ref[...], preferred_element_type=jnp.float32)
    # f32 epilogue (bias add + ReLU) -- safe on v5e (no bf16 VPU path).
    h = jnp.maximum(hx + hy + b1_ref[...], 0.0)
    # Final projection: cast activations to the weight dtype for the MXU push,
    # accumulate in f32, add the SMEM scalar bias.
    h = h.astype(w2_ref.dtype)
    out = jnp.dot(h, w2_ref[...], preferred_element_type=jnp.float32) + b2_ref[0, 0]
    o_ref[...] = out.astype(o_ref.dtype)


def mine_forward(x, y, params, *, tile_b=None, compute_dtype=None):
    """MINE critic forward pass with a Pallas TPU kernel.

    x: [B, dim_x], y: [B, dim_y]  -> returns [B, 1]
    params: dict with w1x [dim_x,H], b1x [H], w1y [dim_y,H], b1y [H],
            w2 [H,1], b2 [1]  (weights already transposed to [in, out]).
    compute_dtype: optional streaming dtype for x/y/weights (e.g. jnp.bfloat16);
                   accumulation and the epilogue stay f32.
    """
    B, dim_x = x.shape
    By, dim_y = y.shape
    assert By == B, (B, By)
    H = params["w1x"].shape[1]
    out_dtype = x.dtype

    # --- parameter prep (not per-step work) -------------------------------
    if compute_dtype is not None:
        x = x.astype(compute_dtype)
        y = y.astype(compute_dtype)
        w1x = params["w1x"].astype(compute_dtype)
        w1y = params["w1y"].astype(compute_dtype)
        w2 = params["w2"].astype(compute_dtype)
    else:
        w1x, w1y, w2 = params["w1x"], params["w1y"], params["w2"]

    # Pre-summed first-layer bias (f32) and SMEM scalar output bias (f32).
    b1 = (params["b1x"].astype(jnp.float32)
          + params["b1y"].astype(jnp.float32)).reshape(1, H)
    b2 = params["b2"].astype(jnp.float32).reshape(1, 1)

    # --- batch tiling ------------------------------------------------------
    if tile_b is None:
        # Aim for >=8 grid steps (DMA double-buffering; work for both v7x TCs)
        # while capping the tile at an efficient 512 rows for large batches.
        tile_b = max(8, min(512, _round_up(pl.cdiv(B, 8), 8)))
    else:
        tile_b = max(8, _round_up(int(tile_b), 8))

    # VMEM budget: x/y/out tiles are each double-buffered; weights are resident.
    # Keep well under the default ~32 MiB scoped limit (v7x physical VMEM is
    # 64 MiB; v5e/v6e 128 MiB).
    in_bytes = jnp.dtype(x.dtype).itemsize
    out_bytes = jnp.dtype(out_dtype).itemsize

    def _tile_vmem(tb):
        return 2 * tb * (dim_x + dim_y) * in_bytes + 2 * tb * out_bytes

    while tile_b > 8 and _tile_vmem(tile_b) > (16 << 20):
        tile_b //= 2
    tile_b = max(8, _round_up(tile_b, 8))

    # Pad ragged batches up to a tile multiple (wrapper-side copy only when
    # B is not already a multiple of the tile).
    Bp = _round_up(B, tile_b)
    if Bp != B:
        x = jnp.pad(x, ((0, Bp - B), (0, 0)))
        y = jnp.pad(y, ((0, Bp - B), (0, 0)))

    grid = (Bp // tile_b,)

    # Advisory cost estimate so XLA can overlap surrounding ops (e.g. the MINE
    # loss reduction) with this mem-bound kernel.
    flops = 2 * Bp * H * (dim_x + dim_y + 1)
    bytes_accessed = (
        x.size * in_bytes + y.size * in_bytes
        + (w1x.size + w1y.size + w2.size) * jnp.dtype(w1x.dtype).itemsize
        + b1.size * 4 + b2.size * 4
        + Bp * out_bytes)
    cost = pl.CostEstimate(flops=flops, transcendentals=0,
                           bytes_accessed=bytes_accessed)

    out = pl.pallas_call(
        mine_kernel,
        out_shape=jax.ShapeDtypeStruct((Bp, 1), out_dtype),
        grid_spec=pltpu.PrefetchScalarGridSpec(
            num_scalar_prefetch=0,
            grid=grid,
            in_specs=[
                pl.BlockSpec((tile_b, dim_x), lambda i: (i, 0)),   # x tile (streamed)
                pl.BlockSpec((tile_b, dim_y), lambda i: (i, 0)),   # y tile (streamed)
                pl.BlockSpec((dim_x, H), lambda i: (0, 0)),        # w1x (resident)
                pl.BlockSpec((dim_y, H), lambda i: (0, 0)),        # w1y (resident)
                pl.BlockSpec((1, H), lambda i: (0, 0)),            # b1 = b1x + b1y
                pl.BlockSpec((H, 1), lambda i: (0, 0)),            # w2 (resident)
                pl.BlockSpec(memory_space=pltpu.MemorySpace.SMEM), # b2 scalar
            ],
            out_specs=pl.BlockSpec((tile_b, 1), lambda i: (i, 0)),
        ),
        compiler_params=pltpu.CompilerParams(
            dimension_semantics=("parallel",)),
        cost_estimate=cost,
    )(x, y, w1x, w1y, b1, w2, b2)

    return out[:B] if Bp != B else out


def init_params(key, dim_x, dim_y, hidden_size, dtype=jnp.float32):
    """Deterministic synthetic init (roughly matching nn.Linear's uniform init)."""
    k1, k2, k3, k4, k5, k6 = jax.random.split(key, 6)

    def lin_init(kw, kb, fan_in, fan_out):
        bound = 1.0 / jnp.sqrt(fan_in)
        # Weight stored transposed: [in, out]
        w = jax.random.uniform(kw, (fan_in, fan_out), dtype, -bound, bound)
        b = jax.random.uniform(kb, (fan_out,), dtype, -bound, bound)
        return w, b

    w1x, b1x = lin_init(k1, k2, dim_x, hidden_size)
    w1y, b1y = lin_init(k3, k4, dim_y, hidden_size)
    w2, b2 = lin_init(k5, k6, hidden_size, 1)
    return {"w1x": w1x, "b1x": b1x, "w1y": w1y, "b1y": b1y, "w2": w2, "b2": b2}


def mine_reference(x, y, p):
    h = jnp.maximum(x @ p["w1x"] + p["b1x"] + y @ p["w1y"] + p["b1y"], 0.0)
    return h @ p["w2"] + p["b2"]


if __name__ == "__main__":
    key = jax.random.PRNGKey(0)
    kx, ky, kp = jax.random.split(key, 3)

    # Ragged batch (exercises the pad/slice path) + default hidden_size=128.
    B, dim_x, dim_y, hidden = 200, 16, 24, 128
    x = jax.random.normal(kx, (B, dim_x), jnp.float32)
    y = jax.random.normal(ky, (B, dim_y), jnp.float32)
    params = init_params(kp, dim_x, dim_y, hidden)

    ref = mine_reference(x, y, params)

    # f32 path: multi-step grid (tile_b auto ~32 -> 7 steps after padding).
    out = jax.block_until_ready(mine_forward(x, y, params))
    assert out.shape == (B, 1), out.shape
    assert jnp.allclose(out, ref, atol=1e-5, rtol=1e-5), (out, ref)

    # bf16 streaming path (halves HBM bytes); f32 accumulation keeps it close.
    out_bf16 = jax.block_until_ready(
        mine_forward(x, y, params, compute_dtype=jnp.bfloat16))
    assert out_bf16.shape == (B, 1), out_bf16.shape
    assert jnp.allclose(out_bf16, ref, atol=1e-1, rtol=5e-2)

    print("KERNEL_OK")
</pallas_src>

<mosaic_0001>
module attributes {stable_mosaic.version = 11 : i64} {
  func.func @mine_kernel(%arg0: i32, %arg1: memref<32x16xf32, #tpu.memory_space<vmem>>, %arg2: memref<32x24xf32, #tpu.memory_space<vmem>>, %arg3: memref<16x128xf32, #tpu.memory_space<vmem>>, %arg4: memref<24x128xf32, #tpu.memory_space<vmem>>, %arg5: memref<1x128xf32, #tpu.memory_space<vmem>>, %arg6: memref<128x1xf32, #tpu.memory_space<vmem>>, %arg7: memref<1x1xf32, #tpu.memory_space<smem>>, %arg8: memref<32x1xf32, #tpu.memory_space<vmem>>) attributes {dimension_semantics = [#tpu.dimension_semantics<parallel>], iteration_bounds = array<i64: 7>, scalar_prefetch = 0 : i64, scratch_operands = 0 : i64, tpu.core_type = #tpu.core_type<tc>, window_params = [{transform_indices = @transform_0, window_bounds = array<i64: 32, 16>}, {transform_indices = @transform_1, window_bounds = array<i64: 32, 24>}, {pipeline_mode = #tpu.pipeline_mode<synchronous>, transform_indices = @transform_2, window_bounds = array<i64: 16, 128>}, {pipeline_mode = #tpu.pipeline_mode<synchronous>, transform_indices = @transform_3, window_bounds = array<i64: 24, 128>}, {pipeline_mode = #tpu.pipeline_mode<synchronous>, transform_indices = @transform_4, window_bounds = array<i64: 1, 128>}, {pipeline_mode = #tpu.pipeline_mode<synchronous>, transform_indices = @transform_5, window_bounds = array<i64: 128, 1>}, {transform_indices = @transform_6, window_bounds = array<i64: 1, 1>}, {transform_indices = @transform_7, window_bounds = array<i64: 32, 1>}]} {
    %c0 = arith.constant 0 : index
    %c0_0 = arith.constant 0 : index
    %0 = vector.load %arg1[%c0, %c0_0] : memref<32x16xf32, #tpu.memory_space<vmem>>, vector<32x16xf32>
    %c0_1 = arith.constant 0 : index
    %c0_2 = arith.constant 0 : index
    %1 = vector.load %arg3[%c0_1, %c0_2] : memref<16x128xf32, #tpu.memory_space<vmem>>, vector<16x128xf32>
    %cst = arith.constant dense<0.000000e+00> : vector<32x128xf32>
    %2 = tpu.matmul %0, %1, %cst {dimension_numbers = #tpu.dot_dimension_numbers<[1], [0], [0], [1], [0, 0, 1, 1], [], []>} : vector<32x16xf32>, vector<16x128xf32>, vector<32x128xf32> -> vector<32x128xf32>
    %c0_3 = arith.constant 0 : index
    %c0_4 = arith.constant 0 : index
    %3 = vector.load %arg2[%c0_3, %c0_4] : memref<32x24xf32, #tpu.memory_space<vmem>>, vector<32x24xf32>
    %c0_5 = arith.constant 0 : index
    %c0_6 = arith.constant 0 : index
    %4 = vector.load %arg4[%c0_5, %c0_6] : memref<24x128xf32, #tpu.memory_space<vmem>>, vector<24x128xf32>
    %cst_7 = arith.constant dense<0.000000e+00> : vector<32x128xf32>
    %5 = tpu.matmul %3, %4, %cst_7 {dimension_numbers = #tpu.dot_dimension_numbers<[1], [0], [0], [1], [0, 0, 1, 1], [], []>} : vector<32x24xf32>, vector<24x128xf32>, vector<32x128xf32> -> vector<32x128xf32>
    %6 = arith.addf %2, %5 : vector<32x128xf32>
    %c0_8 = arith.constant 0 : index
    %c0_9 = arith.constant 0 : index
    %7 = vector.load %arg5[%c0_8, %c0_9] : memref<1x128xf32, #tpu.memory_space<vmem>>, vector<1x128xf32>
    %8 = vector.broadcast %7 : vector<1x128xf32> to vector<32x128xf32>
    %9 = arith.addf %6, %8 : vector<32x128xf32>
    %cst_10 = arith.constant 0.000000e+00 : f32
    %10 = vector.broadcast %cst_10 : f32 to vector<32x128xf32>
    %11 = arith.maximumf %9, %10 : vector<32x128xf32>
    %c0_11 = arith.constant 0 : index
    %c0_12 = arith.constant 0 : index
    %12 = vector.load %arg6[%c0_11, %c0_12] : memref<128x1xf32, #tpu.memory_space<vmem>>, vector<128x1xf32>
    %cst_13 = arith.constant dense<0.000000e+00> : vector<32x1xf32>
    %13 = tpu.matmul %11, %12, %cst_13 {dimension_numbers = #tpu.dot_dimension_numbers<[1], [0], [0], [1], [0, 0, 1, 1], [], []>} : vector<32x128xf32>, vector<128x1xf32>, vector<32x1xf32> -> vector<32x1xf32>
    %c0_14 = arith.constant 0 : index
    %c0_15 = arith.constant 0 : index
    %14 = memref.load %arg7[%c0_14, %c0_15] : memref<1x1xf32, #tpu.memory_space<smem>>
    %15 = vector.broadcast %14 : f32 to vector<32x1xf32>
    %16 = arith.addf %13, %15 : vector<32x1xf32>
    %c0_16 = arith.constant 0 : index
    %c0_17 = arith.constant 0 : index
    %17 = vector.load %arg8[%c0_16, %c0_17] : memref<32x1xf32, #tpu.memory_space<vmem>>, vector<32x1xf32>
    tpu.vector_store %arg8[%c0_16, %c0_17], %16 {strides = array<i32>} : memref<32x1xf32, #tpu.memory_space<vmem>>, vector<32x1xf32>,
    return
  }
  func.func @transform_0(%arg0: i32) -> (i32, i32) {
    %c0_i32 = arith.constant 0 : i32
    %c0_i32_0 = arith.constant 0 : i32
    return %arg0, %c0_i32 : i32, i32
  }
  func.func @transform_1(%arg0: i32) -> (i32, i32) {
    %c0_i32 = arith.constant 0 : i32
    %c0_i32_0 = arith.constant 0 : i32
    return %arg0, %c0_i32 : i32, i32
  }
  func.func @transform_2(%arg0: i32) -> (i32, i32) {
    %c0_i32 = arith.constant 0 : i32
    %c0_i32_0 = arith.constant 0 : i32
    %c0_i32_1 = arith.constant 0 : i32
    return %c0_i32, %c0_i32_0 : i32, i32
  }
  func.func @transform_3(%arg0: i32) -> (i32, i32) {
    %c0_i32 = arith.constant 0 : i32
    %c0_i32_0 = arith.constant 0 : i32
    %c0_i32_1 = arith.constant 0 : i32
    return %c0_i32, %c0_i32_0 : i32, i32
  }
  func.func @transform_4(%arg0: i32) -> (i32, i32) {
    %c0_i32 = arith.constant 0 : i32
    %c0_i32_0 = arith.constant 0 : i32
    %c0_i32_1 = arith.constant 0 : i32
    return %c0_i32, %c0_i32_0 : i32, i32
  }
  func.func @transform_5(%arg0: i32) -> (i32, i32) {
    %c0_i32 = arith.constant 0 : i32
    %c0_i32_0 = arith.constant 0 : i32
    %c0_i32_1 = arith.constant 0 : i32
    return %c0_i32, %c0_i32_0 : i32, i32
  }
  func.func @transform_6(%arg0: i32) -> (i32, i32) {
    %c0_i32 = arith.constant 0 : i32
    %c0_i32_0 = arith.constant 0 : i32
    %c0_i32_1 = arith.constant 0 : i32
    return %c0_i32, %c0_i32_0 : i32, i32
  }
  func.func @transform_7(%arg0: i32) -> (i32, i32) {
    %c0_i32 = arith.constant 0 : i32
    %c0_i32_0 = arith.constant 0 : i32
    return %arg0, %c0_i32 : i32, i32
  }
}

</mosaic_0001>

<llo_original>
// kernel: tpu_custom_call.1
$region0: #{tpu_custom_call.1}
  #allocation0 [shape = 'u32[]', space=smem, size = 0x4, offset = 0x4, fixed_abs, tag = 'smem constant byte address 0x4 - core index']
  #allocation1 [shape = 'u32[144,128]{1,0:T(1,128)}', space=vmem, size = 0x12000, scoped, tag = 'internal scratch']
  #allocation2 [shape = 'f32[1,1]{1,0:T(1,128)S(6)}', space=smem, size = 0x200, scoped, tag = 'scoped memory for tpu_custom_call.1']
  %s0 = inlined_call_operand.vmem [shape: f32[224,16], index: 0, kind: input, shape index: {}]
  %s1 = inlined_call_operand.vmem [shape: f32[224,24], index: 1, kind: input, shape index: {}]
  %s2 = inlined_call_operand.vmem [shape: f32[16,128], index: 2, kind: input, shape index: {}]
  %s3 = inlined_call_operand.vmem [shape: f32[24,128], index: 3, kind: input, shape index: {}]
  %s4 = inlined_call_operand.vmem [shape: f32[1,128], index: 4, kind: input, shape index: {}]
  %s5 = inlined_call_operand.vmem [shape: f32[128,1], index: 5, kind: input, shape index: {}]
  %s6 = inlined_call_operand.<no memory space> [shape: f32[1,1], index: 6, kind: input, shape index: {}]
  %s7 = inlined_call_operand.vmem [shape: f32[224,1], index: 7, kind: output, shape index: {}]
  %s8 = sld [smem:[#allocation0]]
  $region61: #{tpu_custom_call.1} parent=0
    _
  %s10 = ssub.s32 1, %s8
  %s11 = scalar_select 0, %s10, %s8
  %12 = sst [smem:[#allocation2]] %s6
  loop: start=0, step=1, limit=9
  $region2: #{tpu_custom_call.1} parent=0 // loop_pre_header
    _
  $region3: #{tpu_custom_call.1} parent=0 // loop_header
    %s14 = sphi 0, %s18
    %p15 = scmp.ge.s32.totalorder %s14, 9
    %s24 = sphi 0, %s26
    %s27 = sphi 0, %s24
    %s28 = sphi 0, %s27
    %s44 = sphi 0, %s28
    %s50 = sphi 0, %s52
    %s53 = sphi 0, %s50
    %s54 = sphi 0, %s53
    %s70 = sphi 0, %s54
    %s74 = sphi 0, %s74
    %s76 = sphi 0, %s74
    %s77 = sphi 0, %s76
    %s91 = sphi 0, %s77
    %s95 = sphi 0, %s95
    %s97 = sphi 0, %s95
    %s98 = sphi 0, %s97
    %s112 = sphi 0, %s98
    %s116 = sphi 0, %s116
    %s118 = sphi 0, %s116
    %s119 = sphi 0, %s118
    %s133 = sphi 0, %s119
    %s137 = sphi 0, %s137
    %s139 = sphi 0, %s137
    %s140 = sphi 0, %s139
    %s154 = sphi 0, %s140
    %s158 = sphi 0, %s158
    %s160 = sphi 0, %s158
    %s161 = sphi 0, %s160
    %s175 = sphi 0, %s161
    %s181 = sphi 0, %s183
    %s184 = sphi 0, %s181
    %s185 = sphi 0, %s184
    %s201 = sphi 0, %s185
  $region4: #{tpu_custom_call.1} parent=0 // loop_header_branch
    %17 = sbr.rel (%p15) target = $region8
  $region5: #{tpu_custom_call.1} parent=0 // loop_body
    %s19 = ssub.s32 %s14, 1
    %s20 = ssub.s32 %s14, 2
    %s21 = sadd.s32 %s14, 1
    %s22 = ssub.s32 %s14, %s21
    %p23 = scmp.eq.s32.totalorder %s22, 0
    %s25 = sadd.s32 %s24, 1
    %s26 = scalar_select %p23, %s24, %s25
    %p29 = pneg %p23
    %p30 = scmp.eq.s32.totalorder %s14, 6
    %p31 = por %p29, %p30
    %p32 = scmp.ne.s32.totalorder %s24, %s27
    %p33 = scmp.eq.s32.totalorder %s14, 0
    %p34 = por %p32, %p33
    %p35 = scmp.ne.s32.totalorder %s24, %s27
    %p36 = scmp.eq.s32.totalorder %s19, 6
    %p37 = por %p35, %p36
    %p38 = scmp.ne.s32.totalorder %s27, %s28
    %p39 = scmp.eq.s32.totalorder %s19, 0
    %p40 = por %p38, %p39
    %p41 = scmp.ne.s32.totalorder %s27, %s28
    %p42 = scmp.eq.s32.totalorder %s20, 6
    %p43 = por %p41, %p42
    %p45 = scmp.ne.s32.totalorder %s28, %s44
    %p46 = scmp.eq.s32.totalorder %s20, 0
    %p47 = por %p45, %p46
    %s48 = ssub.s32 %s14, %s21
    %p49 = scmp.eq.s32.totalorder %s48, 0
    %s51 = sadd.s32 %s50, 1
    %s52 = scalar_select %p49, %s50, %s51
    %p55 = pneg %p49
    %p56 = scmp.eq.s32.totalorder %s14, 6
    %p57 = por %p55, %p56
    %p58 = scmp.ne.s32.totalorder %s50, %s53
    %p59 = scmp.eq.s32.totalorder %s14, 0
    %p60 = por %p58, %p59
    %p61 = scmp.ne.s32.totalorder %s50, %s53
    %p62 = scmp.eq.s32.totalorder %s19, 6
    %p63 = por %p61, %p62
    %p64 = scmp.ne.s32.totalorder %s53, %s54
    %p65 = scmp.eq.s32.totalorder %s19, 0
    %p66 = por %p64, %p65
    %p67 = scmp.ne.s32.totalorder %s53, %s54
    %p68 = scmp.eq.s32.totalorder %s20, 6
    %p69 = por %p67, %p68
    %p71 = scmp.ne.s32.totalorder %s54, %s70
    %p72 = scmp.eq.s32.totalorder %s20, 0
    %p73 = por %p71, %p72
    %s75 = sadd.s32 %s74, 1
    %p78 = scmp.eq.s32.totalorder %s14, 6
    %p79 = scmp.ne.s32.totalorder %s74, %s76
    %p80 = scmp.eq.s32.totalorder %s14, 0
    %p81 = por %p79, %p80
    %p82 = scmp.ne.s32.totalorder %s74, %s76
    %p83 = scmp.eq.s32.totalorder %s19, 6
    %p84 = por %p82, %p83
    %p85 = scmp.ne.s32.totalorder %s76, %s77
    %p86 = scmp.eq.s32.totalorder %s19, 0
    %p87 = por %p85, %p86
    %p88 = scmp.ne.s32.totalorder %s76, %s77
    %p89 = scmp.eq.s32.totalorder %s20, 6
    %p90 = por %p88, %p89
    %p92 = scmp.ne.s32.totalorder %s77, %s91
    %p93 = scmp.eq.s32.totalorder %s20, 0
    %p94 = por %p92, %p93
    %s96 = sadd.s32 %s95, 1
    %p99 = scmp.eq.s32.totalorder %s14, 6
    %p100 = scmp.ne.s32.totalorder %s95, %s97
    %p101 = scmp.eq.s32.totalorder %s14, 0
    %p102 = por %p100, %p101
    %p103 = scmp.ne.s32.totalorder %s95, %s97
    %p104 = scmp.eq.s32.totalorder %s19, 6
    %p105 = por %p103, %p104
    %p106 = scmp.ne.s32.totalorder %s97, %s98
    %p107 = scmp.eq.s32.totalorder %s19, 0
    %p108 = por %p106, %p107
    %p109 = scmp.ne.s32.totalorder %s97, %s98
    %p110 = scmp.eq.s32.totalorder %s20, 6
    %p111 = por %p109, %p110
    %p113 = scmp.ne.s32.totalorder %s98, %s112
    %p114 = scmp.eq.s32.totalorder %s20, 0
    %p115 = por %p113, %p114
    %s117 = sadd.s32 %s116, 1
    %p120 = scmp.eq.s32.totalorder %s14, 6
    %p121 = scmp.ne.s32.totalorder %s116, %s118
    %p122 = scmp.eq.s32.totalorder %s14, 0
    %p123 = por %p121, %p122
    %p124 = scmp.ne.s32.totalorder %s116, %s118
    %p125 = scmp.eq.s32.totalorder %s19, 6
    %p126 = por %p124, %p125
    %p127 = scmp.ne.s32.totalorder %s118, %s119
    %p128 = scmp.eq.s32.totalorder %s19, 0
    %p129 = por %p127, %p128
    %p130 = scmp.ne.s32.totalorder %s118, %s119
    %p131 = scmp.eq.s32.totalorder %s20, 6
    %p132 = por %p130, %p131
    %p134 = scmp.ne.s32.totalorder %s119, %s133
    %p135 = scmp.eq.s32.totalorder %s20, 0
    %p136 = por %p134, %p135
    %s138 = sadd.s32 %s137, 1
    %p141 = scmp.eq.s32.totalorder %s14, 6
    %p142 = scmp.ne.s32.totalorder %s137, %s139
    %p143 = scmp.eq.s32.totalorder %s14, 0
    %p144 = por %p142, %p143
    %p145 = scmp.ne.s32.totalorder %s137, %s139
    %p146 = scmp.eq.s32.totalorder %s19, 6
    %p147 = por %p145, %p146
    %p148 = scmp.ne.s32.totalorder %s139, %s140
    %p149 = scmp.eq.s32.totalorder %s19, 0
    %p150 = por %p148, %p149
    %p151 = scmp.ne.s32.totalorder %s139, %s140
    %p152 = scmp.eq.s32.totalorder %s20, 6
    %p153 = por %p151, %p152
    %p155 = scmp.ne.s32.totalorder %s140, %s154
    %p156 = scmp.eq.s32.totalorder %s20, 0
    %p157 = por %p155, %p156
    %s159 = sadd.s32 %s158, 1
    %p162 = scmp.eq.s32.totalorder %s14, 6
    %p163 = scmp.ne.s32.totalorder %s158, %s160
    %p164 = scmp.eq.s32.totalorder %s14, 0
    %p165 = por %p163, %p164
    %p166 = scmp.ne.s32.totalorder %s158, %s160
    %p167 = scmp.eq.s32.totalorder %s19, 6
    %p168 = por %p166, %p167
    %p169 = scmp.ne.s32.totalorder %s160, %s161
    %p170 = scmp.eq.s32.totalorder %s19, 0
    %p171 = por %p169, %p170
    %p172 = scmp.ne.s32.totalorder %s160, %s161
    %p173 = scmp.eq.s32.totalorder %s20, 6
    %p174 = por %p172, %p173
    %p176 = scmp.ne.s32.totalorder %s161, %s175
    %p177 = scmp.eq.s32.totalorder %s20, 0
    %p178 = por %p176, %p177
    %s179 = ssub.s32 %s14, %s21
    %p180 = scmp.eq.s32.totalorder %s179, 0
    %s182 = sadd.s32 %s181, 1
    %s183 = scalar_select %p180, %s181, %s182
    %p186 = pneg %p180
    %p187 = scmp.eq.s32.totalorder %s14, 6
    %p188 = por %p186, %p187
    %p189 = scmp.ne.s32.totalorder %s181, %s184
    %p190 = scmp.eq.s32.totalorder %s14, 0
    %p191 = por %p189, %p190
    %p192 = scmp.ne.s32.totalorder %s181, %s184
    %p193 = scmp.eq.s32.totalorder %s19, 6
    %p194 = por %p192, %p193
    %p195 = scmp.ne.s32.totalorder %s184, %s185
    %p196 = scmp.eq.s32.totalorder %s19, 0
    %p197 = por %p195, %p196
    %p198 = scmp.ne.s32.totalorder %s184, %s185
    %p199 = scmp.eq.s32.totalorder %s20, 6
    %p200 = por %p198, %p199
    %p202 = scmp.ne.s32.totalorder %s185, %s201
    %p203 = scmp.eq.s32.totalorder %s20, 0
    %p204 = por %p202, %p203
    %p205 = scmp.le.s32.totalorder 1, %s14
    %p206 = scmp.lt.s32.totalorder %s14, 8
    %p207 = pnand %p205, %p206
    %p208 = pneg %p207
    // Predicated region
    $region9: #{tpu_custom_call.1} parent=5 // pred_check
      _
    $region10: #{tpu_custom_call.1} parent=5 // pred_check_branch
      %210 = sbr.rel (%p207) target = $region12
    $region11: #{tpu_custom_call.1} parent=5 // pred_region
      %s211 = ssub.s32 %s14, 1
      // Predicated region
      $region13: #{tpu_custom_call.1} parent=11 // pred_check
        %p212 = pneg %p87
      $region14: #{tpu_custom_call.1} parent=11 // pred_check_branch
        %214 = sbr.rel (%p212) target = $region16
      $region15: #{tpu_custom_call.1} parent=11 // pred_region
        _
      $region16: #{tpu_custom_call.1} parent=11 // pred_fallthru
        _
      // Predicated region
      $region17: #{tpu_custom_call.1} parent=11 // pred_check
        %p215 = pneg %p108
      $region18: #{tpu_custom_call.1} parent=11 // pred_check_branch
        %217 = sbr.rel (%p215) target = $region20
      $region19: #{tpu_custom_call.1} parent=11 // pred_region
        _
      $region20: #{tpu_custom_call.1} parent=11 // pred_fallthru
        _
      // Predicated region
      $region21: #{tpu_custom_call.1} parent=11 // pred_check
        %p218 = pneg %p129
      $region22: #{tpu_custom_call.1} parent=11 // pred_check_branch
        %220 = sbr.rel (%p218) target = $region24
      $region23: #{tpu_custom_call.1} parent=11 // pred_region
        _
      $region24: #{tpu_custom_call.1} parent=11 // pred_fallthru
        _
      // Predicated region
      $region25: #{tpu_custom_call.1} parent=11 // pred_check
        %p221 = pneg %p150
      $region26: #{tpu_custom_call.1} parent=11 // pred_check_branch
        %223 = sbr.rel (%p221) target = $region28
      $region27: #{tpu_custom_call.1} parent=11 // pred_region
        _
      $region28: #{tpu_custom_call.1} parent=11 // pred_fallthru
        _
      // Predicated region
      $region29: #{tpu_custom_call.1} parent=11 // pred_check
        %p224 = pneg %p171
      $region30: #{tpu_custom_call.1} parent=11 // pred_check_branch
        %226 = sbr.rel (%p224) target = $region32
      $region31: #{tpu_custom_call.1} parent=11 // pred_region
        _
      $region32: #{tpu_custom_call.1} parent=11 // pred_fallthru
        _
    $region12: #{tpu_custom_call.1} parent=5 // pred_fallthru
      _
    %p227 = scmp.lt.s32.totalorder %s14, 7
    // Predicated region
    $region33: #{tpu_custom_call.1} parent=5 // pred_check
      %p228 = pneg %p227
    $region34: #{tpu_custom_call.1} parent=5 // pred_check_branch
      %230 = sbr.rel (%p228) target = $region36
    $region35: #{tpu_custom_call.1} parent=5 // pred_region
      // Predicated region
      $region37: #{tpu_custom_call.1} parent=35 // pred_check
        %p231 = pneg %p34
      $region38: #{tpu_custom_call.1} parent=35 // pred_check_branch
        %233 = sbr.rel (%p231) target = $region40
      $region39: #{tpu_custom_call.1} parent=35 // pred_region
        %s234 = smul.u32 4, %s14
        %p235 = scmp.lt.s32.totalorder %s234, 27
        %s236 = scalar_select %p235, %s234, 27
        %s237 = smul.addr %s236, 8
        %s238 = scalar_lea.vmem %s0, %s237
        %s239 = smul.u32 4, %s14
      $region40: #{tpu_custom_call.1} parent=35 // pred_fallthru
        _
      // Predicated region
      $region41: #{tpu_custom_call.1} parent=35 // pred_check
        %p240 = pneg %p60
      $region42: #{tpu_custom_call.1} parent=35 // pred_check_branch
        %242 = sbr.rel (%p240) target = $region44
      $region43: #{tpu_custom_call.1} parent=35 // pred_region
        %s243 = smul.u32 4, %s14
        %p244 = scmp.lt.s32.totalorder %s243, 27
        %s245 = scalar_select %p244, %s243, 27
        %s246 = smul.addr %s245, 8
        %s247 = scalar_lea.vmem %s1, %s246
        %s248 = smul.u32 4, %s14
      $region44: #{tpu_custom_call.1} parent=35 // pred_fallthru
        _
    $region36: #{tpu_custom_call.1} parent=5 // pred_fallthru
      _
    %p249 = scmp.le.s32.totalorder 1, %s14
    %p250 = scmp.lt.s32.totalorder %s14, 8
    %p251 = pnand %p249, %p250
    %p252 = pneg %p251
    // Predicated region
    $region45: #{tpu_custom_call.1} parent=5 // pred_check
      _
    $region46: #{tpu_custom_call.1} parent=5 // pred_check_branch
      %254 = sbr.rel (%p251) target = $region48
    $region47: #{tpu_custom_call.1} parent=5 // pred_region
      %s255 = ssub.s32 %s14, 1
      %s256 = smul.u32 4, %s19
      %p257 = scmp.lt.s32.totalorder %s256, 27
      %s258 = scalar_select %p257, %s256, 27
      %s259 = smul.addr %s258, 8
      %s260 = scalar_lea.vmem %s0, %s259
      %p261 = pneg %p40
      %p262 = pneg %p37
      %s263 = smul.u32 4, %s19
      %p264 = scmp.lt.s32.totalorder %s263, 27
      %s265 = scalar_select %p264, %s263, 27
      %s266 = smul.addr %s265, 8
      %s267 = scalar_lea.vmem %s1, %s266
      %p268 = pneg %p66
      %p269 = pneg %p63
      %p270 = pneg %p87
      %p271 = pneg %p84
      %p272 = pneg %p108
      %p273 = pneg %p105
      %p274 = pneg %p129
      %p275 = pneg %p126
      %p276 = pneg %p150
      %p277 = pneg %p147
      %p278 = pneg %p171
      %p279 = pneg %p168
      %p280 = pneg %p197
      %p281 = pneg %p194
      %s282 = smul.u32 4, %s19
      %p283 = scmp.lt.s32.totalorder %s282, 27
      %s284 = scalar_select %p283, %s282, 27
      %s285 = smul.addr %s284, 8
      %s286 = scalar_lea.vmem %s7, %s285
      %s287 = smul.u32 4, %s19
      %p288 = scmp.lt.s32.totalorder %s287, 27
      %s289 = scalar_select %p288, %s287, 27
      %s290 = smul.addr %s289, 8
      %s291 = scalar_lea.vmem %s0, %s290
      %s292 = smul.u32 4, %s19
      %s293 = smul.u32 4, %s19
      %p294 = scmp.lt.s32.totalorder %s293, 27
      %s295 = scalar_select %p294, %s293, 27
      %s296 = smul.addr %s295, 8
      %s297 = scalar_lea.vmem %s1, %s296
      %s298 = smul.u32 4, %s19
      %s299 = smul.u32 4, %s19
      %p300 = scmp.lt.s32.totalorder %s299, 27
      %s301 = scalar_select %p300, %s299, 27
      %s302 = smul.addr %s301, 8
      %s303 = scalar_lea.vmem %s7, %s302
      %s304 = smul.u32 4, %s19
      %v305 = vld [vmem:[%s291] sm:$0xff]
      %v306 = vld [vmem:[%s291 + $0x8] sm:$0xff]
      %v307 = vld [vmem:[%s291 + $0x10] sm:$0xff]
      %v308 = vld [vmem:[%s291 + $0x18] sm:$0xff]
      %v309 = vld [vmem:[%s2] sm:$0xff]
      %v310 = vld [vmem:[%s2 + $0x8] sm:$0xff]
      %v311 = vld [vmem:[%s297] sm:$0xff]
      %v312 = vld [vmem:[%s297 + $0x8] sm:$0xff]
      %v313 = vld [vmem:[%s297 + $0x10] sm:$0xff]
      %v314 = vld [vmem:[%s297 + $0x18] sm:$0xff]
      %v315 = vld [vmem:[%s3] sm:$0xff]
      %v316 = vld [vmem:[%s3 + $0x8] sm:$0xff]
      %v317 = vld [vmem:[%s3 + $0x10] sm:$0xff]
      %vm318 = vcmask 195584
      %v320 = vsel %vm318, %v311, 0
      %v323 = vsel %vm318, %v312, 0
      %v326 = vsel %vm318, %v313, 0
      %v329 = vsel %vm318, %v314, 0
      %331 = vmatprep.subr.mxu0 0.0
      %332 = vmatpush1.msra.mxu0 %v315
      %333 = vmatprep.subr.mxu0 0.0
      %334 = vmatpush1.msra.mxu0 %v316
      %335 = vmatprep.subr.mxu0 0.0
      %336 = vmatpush1.msra.mxu0 %v317
      %337 = vmatprep.subr.mxu0 0.0
      %338 = vmatpush1.msra.mxu0 0.0
      %339 = vmatprep.subr.mxu0 0.0
      %340 = vmatpush1.msra.mxu0 0.0
      %341 = vmatprep.subr.mxu0 0.0
      %342 = vmatpush1.msra.mxu0 0.0
      %343 = vmatprep.subr.mxu0 0.0
      %344 = vmatpush1.msra.mxu0 0.0
      %345 = vmatprep.subr.mxu0 0.0
      %346 = vmatpush1.msra.mxu0 0.0
      %347 = vmatprep.subr.mxu0 0.0
      %348 = vmatpush1.msra.mxu0 0.0
      %349 = vmatprep.subr.mxu0 0.0
      %350 = vmatpush1.msra.mxu0 0.0
      %351 = vmatprep.subr.mxu0 0.0
      %352 = vmatpush1.msra.mxu0 0.0
      %353 = vmatprep.subr.mxu0 0.0
      %354 = vmatpush1.msra.mxu0 0.0
      %355 = vmatprep.subr.mxu0 0.0
      %356 = vmatpush1.msra.mxu0 0.0
      %357 = vmatprep.subr.mxu0 0.0
      %358 = vmatpush1.msra.mxu0 0.0
      %359 = vmatprep.subr.mxu0 0.0
      %360 = vmatpush1.msra.mxu0 0.0
      %361 = vmatprep.subr.mxu0 0.0
      %362 = vmatpush1.msra.mxu0 0.0
      %363 = vmatprep.subr.mxu0 0.0
      %364 = vmatpush1.msra.mxu0 0.0
      %365 = vmatprep.subr.mxu0 0.0
      %366 = vmatpush1.msra.mxu0 0.0
      %367 = vmatprep.subr.mxu0 0.0
      %368 = vmatpush1.msra.mxu0 0.0
      %369 = vmatprep.subr.mxu0 0.0
      %370 = vmatpush1.msra.mxu0 0.0
      %371 = vmatprep.subr.mxu0 0.0
      %372 = vmatpush1.msra.mxu0 0.0
      %373 = vmatprep.subr.mxu0 0.0
      %374 = vmatpush1.msra.mxu0 0.0
      %375 = vmatprep.subr.mxu0 0.0
      %376 = vmatpush1.msra.mxu0 0.0
      %377 = vmatprep.subr.mxu0 0.0
      %378 = vmatpush1.msra.mxu0 0.0
      %379 = vmatprep.subr.mxu0 0.0
      %380 = vmatpush1.msra.mxu0 0.0
      %381 = vmatprep.subr.mxu0 0.0
      %382 = vmatpush1.msra.mxu0 0.0
      %383 = vmatprep.subr.mxu0 0.0
      %384 = vmatpush1.msra.mxu0 0.0
      %385 = vmatprep.subr.mxu0 0.0
      %386 = vmatpush1.msra.mxu0 0.0
      %387 = vmatprep.subr.mxu0 0.0
      %388 = vmatpush1.msra.mxu0 0.0
      %389 = vmatprep.subr.mxu0 0.0
      %390 = vmatpush1.msra.mxu0 0.0
      %391 = vmatprep.subr.mxu0 0.0
      %392 = vmatpush1.msra.mxu0 0.0
      %393 = vmatprep.subr.mxu0 0.0
      %394 = vmatpush1.msra.mxu0 0.0
      %395 = vmatprep.mubr.f32.mxu0 0.0
      %396 = vmatmul.mubr.f32.gmra.mrb[0].mxu0 %v320
      %v397 = vpop.f32.mrb[0].mxu0
      %v398 = vadd.f32 0.0, %v397
      %v399 = vpop.f32.mrb[0].mxu0
      %400 = vmatprep.mubr.f32.mxu0 0.0
      %401 = vmatmul.mubr.f32.gmra.mrb[0].mxu0 %v323
      %v402 = vpop.f32.mrb[0].mxu0
      %v403 = vadd.f32 0.0, %v402
      %v404 = vpop.f32.mrb[0].mxu0
      %405 = vmatprep.mubr.f32.mxu0 0.0
      %406 = vmatmul.mubr.f32.gmra.mrb[0].mxu0 %v326
      %v407 = vpop.f32.mrb[0].mxu0
      %v408 = vadd.f32 0.0, %v407
      %v409 = vpop.f32.mrb[0].mxu0
      %410 = vmatprep.mubr.f32.mxu0 0.0
      %411 = vmatmul.mubr.f32.gmra.mrb[0].mxu0 %v329
      %v412 = vpop.f32.mrb[0].mxu0
      %v413 = vadd.f32 0.0, %v412
      %v414 = vpop.f32.mrb[0].mxu0
      %415 = vdwg.mxu0
      %vm416 = vcmask 130048
      %v418 = vsel %vm416, %v305, 0
      %v421 = vsel %vm416, %v306, 0
      %v424 = vsel %vm416, %v307, 0
      %v427 = vsel %vm416, %v308, 0
      %429 = vmatprep.subr.mxu0 0.0
      %430 = vmatpush1.msra.mxu0 %v309
      %431 = vmatprep.subr.mxu0 0.0
      %432 = vmatpush1.msra.mxu0 %v310
      %433 = vmatprep.subr.mxu0 0.0
      %434 = vmatpush1.msra.mxu0 0.0
      %435 = vmatprep.subr.mxu0 0.0
      %436 = vmatpush1.msra.mxu0 0.0
      %437 = vmatprep.subr.mxu0 0.0
      %438 = vmatpush1.msra.mxu0 0.0
      %439 = vmatprep.subr.mxu0 0.0
      %440 = vmatpush1.msra.mxu0 0.0
      %441 = vmatprep.subr.mxu0 0.0
      %442 = vmatpush1.msra.mxu0 0.0
      %443 = vmatprep.subr.mxu0 0.0
      %444 = vmatpush1.msra.mxu0 0.0
      %445 = vmatprep.subr.mxu0 0.0
      %446 = vmatpush1.msra.mxu0 0.0
      %447 = vmatprep.subr.mxu0 0.0
      %448 = vmatpush1.msra.mxu0 0.0
      %449 = vmatprep.subr.mxu0 0.0
      %450 = vmatpush1.msra.mxu0 0.0
      %451 = vmatprep.subr.mxu0 0.0
      %452 = vmatpush1.msra.mxu0 0.0
      %453 = vmatprep.subr.mxu0 0.0
      %454 = vmatpush1.msra.mxu0 0.0
      %455 = vmatprep.subr.mxu0 0.0
      %456 = vmatpush1.msra.mxu0 0.0
      %457 = vmatprep.subr.mxu0 0.0
      %458 = vmatpush1.msra.mxu0 0.0
      %459 = vmatprep.subr.mxu0 0.0
      %460 = vmatpush1.msra.mxu0 0.0
      %461 = vmatprep.subr.mxu0 0.0
      %462 = vmatpush1.msra.mxu0 0.0
      %463 = vmatprep.subr.mxu0 0.0
      %464 = vmatpush1.msra.mxu0 0.0
      %465 = vmatprep.subr.mxu0 0.0
      %466 = vmatpush1.msra.mxu0 0.0
      %467 = vmatprep.subr.mxu0 0.0
      %468 = vmatpush1.msra.mxu0 0.0
      %469 = vmatprep.subr.mxu0 0.0
      %470 = vmatpush1.msra.mxu0 0.0
      %471 = vmatprep.subr.mxu0 0.0
      %472 = vmatpush1.msra.mxu0 0.0
      %473 = vmatprep.subr.mxu0 0.0
      %474 = vmatpush1.msra.mxu0 0.0
      %475 = vmatprep.subr.mxu0 0.0
      %476 = vmatpush1.msra.mxu0 0.0
      %477 = vmatprep.subr.mxu0 0.0
      %478 = vmatpush1.msra.mxu0 0.0
      %479 = vmatprep.subr.mxu0 0.0
      %480 = vmatpush1.msra.mxu0 0.0
      %481 = vmatprep.subr.mxu0 0.0
      %482 = vmatpush1.msra.mxu0 0.0
      %483 = vmatprep.subr.mxu0 0.0
      %484 = vmatpush1.msra.mxu0 0.0
      %485 = vmatprep.subr.mxu0 0.0
      %486 = vmatpush1.msra.mxu0 0.0
      %487 = vmatprep.subr.mxu0 0.0
      %488 = vmatpush1.msra.mxu0 0.0
      %489 = vmatprep.subr.mxu0 0.0
      %490 = vmatpush1.msra.mxu0 0.0
      %491 = vmatprep.subr.mxu0 0.0
      %492 = vmatpush1.msra.mxu0 0.0
      %493 = vmatprep.mubr.f32.mxu0 0.0
      %494 = vmatmul.mubr.f32.gmra.mrb[0].mxu0 %v418
      %v495 = vpop.f32.mrb[0].mxu0
      %v496 = vadd.f32 %v398, %v495
      %v497 = vpop.f32.mrb[0].mxu0
      %498 = vmatprep.mubr.f32.mxu0 0.0
      %499 = vmatmul.mubr.f32.gmra.mrb[0].mxu0 %v421
      %v500 = vpop.f32.mrb[0].mxu0
      %v501 = vadd.f32 %v403, %v500
      %v502 = vpop.f32.mrb[0].mxu0
      %503 = vmatprep.mubr.f32.mxu0 0.0
      %504 = vmatmul.mubr.f32.gmra.mrb[0].mxu0 %v424
      %v505 = vpop.f32.mrb[0].mxu0
      %v506 = vadd.f32 %v408, %v505
      %v507 = vpop.f32.mrb[0].mxu0
      %508 = vmatprep.mubr.f32.mxu0 0.0
      %509 = vmatmul.mubr.f32.gmra.mrb[0].mxu0 %v427
      %v510 = vpop.f32.mrb[0].mxu0
      %v511 = vadd.f32 %v413, %v510
      %v512 = vpop.f32.mrb[0].mxu0
      %513 = vdwg.mxu0
      %v514 = vld [vmem:[%s4] sm:$0x1]
      %v516 = vlaneseq
      %v517 = vshrl.u32 %v516, 7
      %v518 = vsub.s32 0, %v517
      %v519 = vrot.slane %v514, %v518
      %v521 = vadd.f32 %v496, %v519
      %v522 = vadd.f32 %v501, %v519
      %v523 = vadd.f32 %v506, %v519
      %v524 = vadd.f32 %v511, %v519
      %v525 = vmax.f32 %v521, 0.0
      %v526 = vmax.f32 %v522, 0.0
      %v527 = vmax.f32 %v523, 0.0
      %v528 = vmax.f32 %v524, 0.0
      %v529 = vld [vmem:[%s5] sm:$0xff]
      %v530 = vld [vmem:[%s5 + $0x8] sm:$0xff]
      %v531 = vld [vmem:[%s5 + $0x10] sm:$0xff]
      %v532 = vld [vmem:[%s5 + $0x18] sm:$0xff]
      %v533 = vld [vmem:[%s5 + $0x20] sm:$0xff]
      %v534 = vld [vmem:[%s5 + $0x28] sm:$0xff]
      %v535 = vld [vmem:[%s5 + $0x30] sm:$0xff]
      %v536 = vld [vmem:[%s5 + $0x38] sm:$0xff]
      %v537 = vld [vmem:[%s5 + $0x40] sm:$0xff]
      %v538 = vld [vmem:[%s5 + $0x48] sm:$0xff]
      %v539 = vld [vmem:[%s5 + $0x50] sm:$0xff]
      %v540 = vld [vmem:[%s5 + $0x58] sm:$0xff]
      %v541 = vld [vmem:[%s5 + $0x60] sm:$0xff]
      %v542 = vld [vmem:[%s5 + $0x68] sm:$0xff]
      %v543 = vld [vmem:[%s5 + $0x70] sm:$0xff]
      %v544 = vld [vmem:[%s5 + $0x78] sm:$0xff]
      %s545 = sld [smem:[#allocation2]]
      %v546 = vstv %s545
      %547 = vmatprep.subr.mxu0 0.0
      %548 = vmatpush1.msra.mxu0 %v529
      %549 = vmatprep.subr.mxu0 0.0
      %550 = vmatpush1.msra.mxu0 %v530
      %551 = vmatprep.subr.mxu0 0.0
      %552 = vmatpush1.msra.mxu0 %v531
      %553 = vmatprep.subr.mxu0 0.0
      %554 = vmatpush1.msra.mxu0 %v532
      %555 = vmatprep.subr.mxu0 0.0
      %556 = vmatpush1.msra.mxu0 %v533
      %557 = vmatprep.subr.mxu0 0.0
      %558 = vmatpush1.msra.mxu0 %v534
      %559 = vmatprep.subr.mxu0 0.0
      %560 = vmatpush1.msra.mxu0 %v535
      %561 = vmatprep.subr.mxu0 0.0
      %562 = vmatpush1.msra.mxu0 %v536
      %563 = vmatprep.subr.mxu0 0.0
      %564 = vmatpush1.msra.mxu0 %v537
      %565 = vmatprep.subr.mxu0 0.0
      %566 = vmatpush1.msra.mxu0 %v538
      %567 = vmatprep.subr.mxu0 0.0
      %568 = vmatpush1.msra.mxu0 %v539
      %569 = vmatprep.subr.mxu0 0.0
      %570 = vmatpush1.msra.mxu0 %v540
      %571 = vmatprep.subr.mxu0 0.0
      %572 = vmatpush1.msra.mxu0 %v541
      %573 = vmatprep.subr.mxu0 0.0
      %574 = vmatpush1.msra.mxu0 %v542
      %575 = vmatprep.subr.mxu0 0.0
      %576 = vmatpush1.msra.mxu0 %v543
      %577 = vmatprep.subr.mxu0 0.0
      %578 = vmatpush1.msra.mxu0 %v544
      %579 = vmatprep.subr.mxu0 0.0
      %580 = vmatpush1.msra.mxu0 0.0
      %581 = vmatprep.subr.mxu0 0.0
      %582 = vmatpush1.msra.mxu0 0.0
      %583 = vmatprep.subr.mxu0 0.0
      %584 = vmatpush1.msra.mxu0 0.0
      %585 = vmatprep.subr.mxu0 0.0
      %586 = vmatpush1.msra.mxu0 0.0
      %587 = vmatprep.subr.mxu0 0.0
      %588 = vmatpush1.msra.mxu0 0.0
      %589 = vmatprep.subr.mxu0 0.0
      %590 = vmatpush1.msra.mxu0 0.0
      %591 = vmatprep.subr.mxu0 0.0
      %592 = vmatpush1.msra.mxu0 0.0
      %593 = vmatprep.subr.mxu0 0.0
      %594 = vmatpush1.msra.mxu0 0.0
      %595 = vmatprep.subr.mxu0 0.0
      %596 = vmatpush1.msra.mxu0 0.0
      %597 = vmatprep.subr.mxu0 0.0
      %598 = vmatpush1.msra.mxu0 0.0
      %599 = vmatprep.subr.mxu0 0.0
      %600 = vmatpush1.msra.mxu0 0.0
      %601 = vmatprep.subr.mxu0 0.0
      %602 = vmatpush1.msra.mxu0 0.0
      %603 = vmatprep.subr.mxu0 0.0
      %604 = vmatpush1.msra.mxu0 0.0
      %605 = vmatprep.subr.mxu0 0.0
      %606 = vmatpush1.msra.mxu0 0.0
      %607 = vmatprep.subr.mxu0 0.0
      %608 = vmatpush1.msra.mxu0 0.0
      %609 = vmatprep.subr.mxu0 0.0
      %610 = vmatpush1.msra.mxu0 0.0
      %611 = vmatprep.mubr.f32.mxu0 0.0
      %612 = vmatmul.mubr.f32.gmra.mrb[0].mxu0 %v525
      %v613 = vpop.f32.mrb[0].mxu0
      %v614 = vadd.f32 %v546, %v613
      %v615 = vpop.f32.mrb[0].mxu0
      %616 = vmatprep.mubr.f32.mxu0 0.0
      %617 = vmatmul.mubr.f32.gmra.mrb[0].mxu0 %v526
      %v618 = vpop.f32.mrb[0].mxu0
      %v619 = vadd.f32 %v546, %v618
      %v620 = vpop.f32.mrb[0].mxu0
      %621 = vmatprep.mubr.f32.mxu0 0.0
      %622 = vmatmul.mubr.f32.gmra.mrb[0].mxu0 %v527
      %v623 = vpop.f32.mrb[0].mxu0
      %v624 = vadd.f32 %v546, %v623
      %v625 = vpop.f32.mrb[0].mxu0
      %626 = vmatprep.mubr.f32.mxu0 0.0
      %627 = vmatmul.mubr.f32.gmra.mrb[0].mxu0 %v528
      %v628 = vpop.f32.mrb[0].mxu0
      %v629 = vadd.f32 %v546, %v628
      %v630 = vpop.f32.mrb[0].mxu0
      %631 = vdwg.mxu0
      %vm632 = vcmask 7168
      %633 = vst.msk [vmem:[%s303] sm:$0xff] %vm632, %v614
      %634 = vst.msk [vmem:[%s303 + $0x8] sm:$0xff] %vm632, %v619
      %635 = vst.msk [vmem:[%s303 + $0x10] sm:$0xff] %vm632, %v624
      %636 = vst.msk [vmem:[%s303 + $0x18] sm:$0xff] %vm632, %v629
      %s637 = smul.u32 4, %s19
      %p638 = scmp.lt.s32.totalorder %s637, 27
      %s639 = scalar_select %p638, %s637, 27
      %s640 = smul.addr %s639, 8
      %s641 = scalar_lea.vmem %s7, %s640
      // Predicated region
      $region49: #{tpu_custom_call.1} parent=47 // pred_check
        %p642 = pneg %p194
      $region50: #{tpu_custom_call.1} parent=47 // pred_check_branch
        %644 = sbr.rel (%p642) target = $region52
      $region51: #{tpu_custom_call.1} parent=47 // pred_region
        %s645 = smul.u32 4, %s19
      $region52: #{tpu_custom_call.1} parent=47 // pred_fallthru
        _
    $region48: #{tpu_custom_call.1} parent=5 // pred_fallthru
      _
    %p646 = scmp.le.s32.totalorder 2, %s14
    // Predicated region
    $region53: #{tpu_custom_call.1} parent=5 // pred_check
      %p647 = pneg %p646
    $region54: #{tpu_custom_call.1} parent=5 // pred_check_branch
      %649 = sbr.rel (%p647) target = $region56
    $region55: #{tpu_custom_call.1} parent=5 // pred_region
      %s650 = ssub.s32 %s14, 2
      // Predicated region
      $region57: #{tpu_custom_call.1} parent=55 // pred_check
        %p651 = pneg %p200
      $region58: #{tpu_custom_call.1} parent=55 // pred_check_branch
        %653 = sbr.rel (%p651) target = $region60
      $region59: #{tpu_custom_call.1} parent=55 // pred_region
        %s654 = smul.u32 4, %s20
        %p655 = scmp.lt.s32.totalorder %s654, 27
        %s656 = scalar_select %p655, %s654, 27
        %s657 = smul.addr %s656, 8
        %s658 = scalar_lea.vmem %s7, %s657
      $region60: #{tpu_custom_call.1} parent=55 // pred_fallthru
        _
    $region56: #{tpu_custom_call.1} parent=5 // pred_fallthru
      _
  $region6: #{tpu_custom_call.1} parent=0 // loop_footer
    %s18 = sadd.s32 1, %s14
  $region7: #{tpu_custom_call.1} parent=0 // loop_footer_branch
    %13 = sbr.rel target = $region3
  $region8: #{tpu_custom_call.1} parent=0 // loop_exit
    _

</llo_original>
